<compile_context>
chip_gen: v7x
topology: tpu7x:2x2x1
jax: 0.10.0
libtpu: 0.0.40
codegen_flags: <defaults>
</compile_context>

<pallas_src>
import numpy as np
import jax
import jax.numpy as jnp
from jax.experimental import pallas as pl
from jax.experimental.pallas import tpu as pltpu


# --------------------------------------------------------------------------- #
# Kernel
# --------------------------------------------------------------------------- #
def make_sbblock_kernel(K, P, Wp, npix):
    """Fused SBBlock core for one group of images.

    Layout inside the kernel: (batch*channel) planes on sublanes, flattened
    padded pooled spatial (npix = Hp*Wp, plus halos) on lanes, so every
    factorized-depthwise tap is a plain lane-offset load from the ref and the
    (block-diagonal) 1x1 conv / upsample are two clean MXU matmuls whose
    results are already lane-dense.
    """

    def kernel(xpf_ref, wcat_ref, w2_ref, mup_ref, bias_ref, o_ref):
        # xpf_ref : (G*C, L)        padded pooled planes, spatial flat on lanes,
        #                           with E = P*Wp extra zeros on each end so
        #                           every tap read stays in-bounds.
        # wcat_ref: (G*C, 2K+2)     packed per-channel params (tiled per image):
        #                           [wv'(K) | wh'(K) | bn_shift(v+h) | alpha]
        #                           (branch-BN scales folded into wv'/wh')
        # w2_ref  : (G*Cout, G*C)   block-diagonal 1x1 conv weight with the
        #                           final-BN scale folded in.
        # mup_ref : (npix, H*W)     bilinear-upsample matrix over padded flat
        #                           indices (zero rows at padding positions).
        # bias_ref: (G*Cout, 1)     final-BN shift (tiled per image).
        # o_ref   : (G*Cout, H*W)   lane-dense output block (== NCHW flattened).
        wc = wcat_ref[...]                                    # (G*C, 2K+2)

        # Factorized depthwise conv: each tap is a static lane-offset ref load,
        # scaled by its per-channel (BN-folded) weight column.
        acc = xpf_ref[:, 0:npix] * wc[:, 0:1]                 # vertical tap k=0
        for k in range(1, K):                                 # vertical taps
            st = k * Wp
            acc += xpf_ref[:, st:st + npix] * wc[:, k:k + 1]
        for k in range(K):                                    # horizontal taps
            st = P * Wp + k - P
            acc += xpf_ref[:, st:st + npix] * wc[:, K + k:K + k + 1]

        acc += wc[:, 2 * K:2 * K + 1]                         # summed BN shifts
        alpha = wc[:, 2 * K + 1:2 * K + 2]
        sact = jnp.where(acc >= 0.0, acc, alpha * acc)        # per-channel PReLU

        # 1x1 conv for the whole group: block-diagonal channel matmul on MXU.
        y1 = jnp.dot(w2_ref[...], sact, preferred_element_type=jnp.float32)
        # Fused bilinear upsample: (G*Cout, npix) @ (npix, H*W); padding
        # columns of y1 hit zero rows of mup, so they contribute exactly 0.
        yf = jnp.dot(y1, mup_ref[...], preferred_element_type=jnp.float32)

        o_ref[...] = yf + bias_ref[...]                       # final BN shift

    return kernel


# --------------------------------------------------------------------------- #
# Host-side helpers
# --------------------------------------------------------------------------- #
def _bilinear_matrix(n_in, n_out):
    """Interpolation matrix of F.interpolate(mode='bilinear', align_corners=True)."""
    M = np.zeros((n_out, n_in), dtype=np.float32)
    if n_in == 1 or n_out == 1:
        M[:, 0] = 1.0
        return M
    for i in range(n_out):
        src = i * (n_in - 1) / (n_out - 1)
        lo = int(np.floor(src))
        hi = min(lo + 1, n_in - 1)
        f = src - lo
        M[i, lo] += 1.0 - f
        M[i, hi] += f
    return M


def _upsample_matrix_padded(Hs, Ws, H, W, P):
    """kron(Mh, Mw) re-indexed over PADDED flat positions (zero rows for pad)."""
    Hp, Wp = Hs + 2 * P, Ws + 2 * P
    kr = np.kron(_bilinear_matrix(Hs, H), _bilinear_matrix(Ws, W))  # (H*W, Hs*Ws)
    M = np.zeros((Hp * Wp, H * W), dtype=np.float32)
    for i in range(Hs):
        for j in range(Ws):
            M[(i + P) * Wp + (j + P), :] = kr[:, i * Ws + j]
    return jnp.asarray(M)


# --------------------------------------------------------------------------- #
# Forward
# --------------------------------------------------------------------------- #
def sbblock_forward(x_nchw, params, *, kernel_size, scale_factor, bn_eps,
                    batch_tile=None):
    """SBBlock forward. x_nchw: (B, C, H, W) float32 -> (B, Cout, H, W)."""
    K = kernel_size
    P = K // 2
    s = scale_factor

    x = x_nchw.astype(jnp.float32)
    B, C, H, W = x.shape
    Cout = params["w2"].shape[0]
    # TODO(synk): PyTorch AvgPool2d silently truncates non-divisible inputs;
    #             this implementation requires H % s == 0 and W % s == 0.
    assert H % s == 0 and W % s == 0
    Hs, Ws = H // s, W // s
    Hp, Wp = Hs + 2 * P, Ws + 2 * P
    npix = Hp * Wp
    E = P * Wp                      # halo so every tap read is in-bounds
    L = npix + 2 * E

    G = B if batch_tile is None else batch_tile   # images per grid step
    assert B % G == 0

    # --- XLA glue (single fused pass over x, no transposes): pool, pad, flatten
    xs = x.reshape(B, C, Hs, s, Ws, s).mean(axis=(3, 5))            # (B,C,Hs,Ws)
    xp = jnp.pad(xs, ((0, 0), (0, 0), (P, P), (P, P)))              # (B,C,Hp,Wp)
    xpf = jnp.pad(xp.reshape(B * C, npix), ((0, 0), (E, E)))        # (B*C, L)

    # --- fold BatchNorms into the (tiny) weights, pack per-channel params ----
    def bn_fold(gamma, beta, mean, var):
        sc = gamma / jnp.sqrt(var + bn_eps)
        return sc, beta - mean * sc

    scv, shv = bn_fold(*params["bn_v"])
    sch, shh = bn_fold(*params["bn_h"])
    sc2, sh2 = bn_fold(*params["bn2"])

    wv_f = params["wv"] * scv[None, :]                              # (K, C)
    wh_f = params["wh"] * sch[None, :]                              # (K, C)
    wcat = jnp.concatenate(
        [wv_f, wh_f, (shv + shh)[None, :], params["alpha"][None, :]],
        axis=0).T                                                   # (C, 2K+2)
    wcat_t = jnp.tile(wcat, (G, 1))                                 # (G*C, 2K+2)
    w2_f = params["w2"] * sc2[:, None]                              # (Cout, C)
    w2_bd = jnp.kron(jnp.eye(G, dtype=jnp.float32), w2_f)           # (G*Cout,G*C)
    bias_t = jnp.tile(sh2[:, None], (G, 1))                         # (G*Cout, 1)

    mup = _upsample_matrix_padded(Hs, Ws, H, W, P)                  # (npix, H*W)

    kernel = make_sbblock_kernel(K, P, Wp, npix)
    y = pl.pallas_call(
        kernel,
        out_shape=jax.ShapeDtypeStruct((B * Cout, H * W), jnp.float32),
        grid_spec=pltpu.PrefetchScalarGridSpec(
            num_scalar_prefetch=0,
            grid=(B // G,),
            in_specs=[
                pl.BlockSpec((G * C, L), lambda g: (g, 0)),
                pl.BlockSpec((G * C, 2 * K + 2), lambda g: (0, 0)),
                pl.BlockSpec((G * Cout, G * C), lambda g: (0, 0)),
                pl.BlockSpec((npix, H * W), lambda g: (0, 0)),
                pl.BlockSpec((G * Cout, 1), lambda g: (0, 0)),
            ],
            out_specs=pl.BlockSpec((G * Cout, H * W), lambda g: (g, 0)),
        ),
        compiler_params=pltpu.CompilerParams(
            dimension_semantics=("parallel",)),
    )(xpf, wcat_t, w2_bd, mup, bias_t)

    return y.reshape(B, Cout, H, W)                                 # free reshape


# --------------------------------------------------------------------------- #
# Pure-JAX reference (mirrors the PyTorch module, eval-mode BN) and params
# --------------------------------------------------------------------------- #
def sbblock_reference(x, params, *, kernel_size, scale_factor, bn_eps):
    K, P, s = kernel_size, kernel_size // 2, scale_factor
    B, C, H, W = x.shape
    Hs, Ws = H // s, W // s
    xs = x.reshape(B, C, Hs, s, Ws, s).mean(axis=(3, 5))

    def bn(z, g, b, m, v):
        return (z - m[None, :, None, None]) / jnp.sqrt(v[None, :, None, None] + bn_eps) \
            * g[None, :, None, None] + b[None, :, None, None]

    xv = jnp.pad(xs, ((0, 0), (0, 0), (P, P), (0, 0)))
    conv_v = sum(xv[:, :, k:k + Hs, :] * params["wv"][k][None, :, None, None]
                 for k in range(K))
    xh = jnp.pad(xs, ((0, 0), (0, 0), (0, 0), (P, P)))
    conv_h = sum(xh[:, :, :, k:k + Ws] * params["wh"][k][None, :, None, None]
                 for k in range(K))
    z = bn(conv_v, *params["bn_v"]) + bn(conv_h, *params["bn_h"])
    a = params["alpha"][None, :, None, None]
    z = jnp.where(z >= 0.0, z, a * z)
    y = jnp.einsum("oc,bchw->bohw", params["w2"], z)
    Mh = jnp.asarray(_bilinear_matrix(Hs, H))
    Mw = jnp.asarray(_bilinear_matrix(Ws, W))
    y = jnp.einsum("Hh,bohw->boHw", Mh, y)
    y = jnp.einsum("Ww,boHw->boHW", Mw, y)
    return bn(y, *params["bn2"])


def init_params(key, in_channels, out_channels, kernel_size):
    """Deterministic synthetic parameters (shapes follow the PyTorch module)."""
    K, C, Cout = kernel_size, in_channels, out_channels
    kv, kh, k2 = jax.random.split(key, 3)
    f32 = jnp.float32
    # depthwise weights: PyTorch (C,1,K,1)/(C,1,1,K) -> stored as (K, C)
    wv = jax.random.normal(kv, (K, C), dtype=f32) * 0.1
    wh = jax.random.normal(kh, (K, C), dtype=f32) * 0.1
    # 1x1 conv weight: PyTorch (Cout, C, 1, 1) -> stored as (Cout, C), bias=False
    w2 = jax.random.normal(k2, (Cout, C), dtype=f32) * 0.1
    # BatchNorm defaults: gamma=1, beta=0, running_mean=0, running_var=1
    bn_c = (jnp.ones((C,), f32), jnp.zeros((C,), f32),
            jnp.zeros((C,), f32), jnp.ones((C,), f32))
    bn_o = (jnp.ones((Cout,), f32), jnp.zeros((Cout,), f32),
            jnp.zeros((Cout,), f32), jnp.ones((Cout,), f32))
    alpha = jnp.full((C,), 0.25, f32)                              # PReLU default
    return {"wv": wv, "wh": wh, "w2": w2, "bn_v": bn_c, "bn_h": bn_c,
            "bn2": bn_o, "alpha": alpha}


if __name__ == "__main__":
    in_channels = 8
    out_channels = 16
    kernel_size = 3
    scale_factor = 2
    bn_eps = 1e-3

    key = jax.random.PRNGKey(0)
    kx, kp = jax.random.split(key)
    x = jax.random.normal(kx, (2, in_channels, 16, 16), dtype=jnp.float32)
    params = init_params(kp, in_channels, out_channels, kernel_size)

    out = sbblock_forward(x, params, kernel_size=kernel_size,
                          scale_factor=scale_factor, bn_eps=bn_eps)
    out = jax.block_until_ready(out)
    assert out.shape == (2, out_channels, 16, 16)
    assert bool(jnp.all(jnp.isfinite(out)))

    ref = sbblock_reference(x, params, kernel_size=kernel_size,
                            scale_factor=scale_factor, bn_eps=bn_eps)
    ref = jax.block_until_ready(ref)
    assert bool(jnp.allclose(out, ref, atol=2e-2, rtol=2e-2)), \
        "fused kernel diverged from reference"

    print("KERNEL_OK")
</pallas_src>

<mosaic_0001>
module attributes {stable_mosaic.version = 11 : i64} {
  func.func @kernel(%arg0: i32, %arg1: memref<16x120xf32, #tpu.memory_space<vmem>>, %arg2: memref<16x8xf32, #tpu.memory_space<vmem>>, %arg3: memref<32x16xf32, #tpu.memory_space<vmem>>, %arg4: memref<100x256xf32, #tpu.memory_space<vmem>>, %arg5: memref<32x1xf32, #tpu.memory_space<vmem>>, %arg6: memref<32x256xf32, #tpu.memory_space<vmem>>) attributes {dimension_semantics = [#tpu.dimension_semantics<parallel>], iteration_bounds = array<i64: 1>, scalar_prefetch = 0 : i64, scratch_operands = 0 : i64, tpu.core_type = #tpu.core_type<tc>, window_params = [{transform_indices = @transform_0, window_bounds = array<i64: 16, 120>}, {pipeline_mode = #tpu.pipeline_mode<synchronous>, transform_indices = @transform_1, window_bounds = array<i64: 16, 8>}, {pipeline_mode = #tpu.pipeline_mode<synchronous>, transform_indices = @transform_2, window_bounds = array<i64: 32, 16>}, {pipeline_mode = #tpu.pipeline_mode<synchronous>, transform_indices = @transform_3, window_bounds = array<i64: 100, 256>}, {pipeline_mode = #tpu.pipeline_mode<synchronous>, transform_indices = @transform_4, window_bounds = array<i64: 32, 1>}, {transform_indices = @transform_5, window_bounds = array<i64: 32, 256>}]} {
    %c0 = arith.constant 0 : index
    %c0_0 = arith.constant 0 : index
    %0 = vector.load %arg2[%c0, %c0_0] : memref<16x8xf32, #tpu.memory_space<vmem>>, vector<16x8xf32>
    %c0_1 = arith.constant 0 : index
    %c0_2 = arith.constant 0 : index
    %1 = vector.load %arg1[%c0_1, %c0_2] : memref<16x120xf32, #tpu.memory_space<vmem>>, vector<16x100xf32>
    %2 = vector.extract_strided_slice %0 {offsets = [0, 0], sizes = [16, 1], strides = [1, 1]} : vector<16x8xf32> to vector<16x1xf32>
    %3 = vector.broadcast %2 : vector<16x1xf32> to vector<16x100xf32>
    %4 = arith.mulf %1, %3 : vector<16x100xf32>
    %c0_3 = arith.constant 0 : index
    %c10 = arith.constant 10 : index
    %5 = vector.load %arg1[%c0_3, %c10] : memref<16x120xf32, #tpu.memory_space<vmem>>, vector<16x100xf32>
    %6 = vector.extract_strided_slice %0 {offsets = [0, 1], sizes = [16, 1], strides = [1, 1]} : vector<16x8xf32> to vector<16x1xf32>
    %7 = vector.broadcast %6 : vector<16x1xf32> to vector<16x100xf32>
    %8 = arith.mulf %5, %7 : vector<16x100xf32>
    %9 = arith.addf %4, %8 : vector<16x100xf32>
    %c0_4 = arith.constant 0 : index
    %c20 = arith.constant 20 : index
    %10 = vector.load %arg1[%c0_4, %c20] : memref<16x120xf32, #tpu.memory_space<vmem>>, vector<16x100xf32>
    %11 = vector.extract_strided_slice %0 {offsets = [0, 2], sizes = [16, 1], strides = [1, 1]} : vector<16x8xf32> to vector<16x1xf32>
    %12 = vector.broadcast %11 : vector<16x1xf32> to vector<16x100xf32>
    %13 = arith.mulf %10, %12 : vector<16x100xf32>
    %14 = arith.addf %9, %13 : vector<16x100xf32>
    %c0_5 = arith.constant 0 : index
    %c9 = arith.constant 9 : index
    %15 = vector.load %arg1[%c0_5, %c9] : memref<16x120xf32, #tpu.memory_space<vmem>>, vector<16x100xf32>
    %16 = vector.extract_strided_slice %0 {offsets = [0, 3], sizes = [16, 1], strides = [1, 1]} : vector<16x8xf32> to vector<16x1xf32>
    %17 = vector.broadcast %16 : vector<16x1xf32> to vector<16x100xf32>
    %18 = arith.mulf %15, %17 : vector<16x100xf32>
    %19 = arith.addf %14, %18 : vector<16x100xf32>
    %c0_6 = arith.constant 0 : index
    %c10_7 = arith.constant 10 : index
    %20 = vector.load %arg1[%c0_6, %c10_7] : memref<16x120xf32, #tpu.memory_space<vmem>>, vector<16x100xf32>
    %21 = vector.extract_strided_slice %0 {offsets = [0, 4], sizes = [16, 1], strides = [1, 1]} : vector<16x8xf32> to vector<16x1xf32>
    %22 = vector.broadcast %21 : vector<16x1xf32> to vector<16x100xf32>
    %23 = arith.mulf %20, %22 : vector<16x100xf32>
    %24 = arith.addf %19, %23 : vector<16x100xf32>
    %c0_8 = arith.constant 0 : index
    %c11 = arith.constant 11 : index
    %25 = vector.load %arg1[%c0_8, %c11] : memref<16x120xf32, #tpu.memory_space<vmem>>, vector<16x100xf32>
    %26 = vector.extract_strided_slice %0 {offsets = [0, 5], sizes = [16, 1], strides = [1, 1]} : vector<16x8xf32> to vector<16x1xf32>
    %27 = vector.broadcast %26 : vector<16x1xf32> to vector<16x100xf32>
    %28 = arith.mulf %25, %27 : vector<16x100xf32>
    %29 = arith.addf %24, %28 : vector<16x100xf32>
    %30 = vector.extract_strided_slice %0 {offsets = [0, 6], sizes = [16, 1], strides = [1, 1]} : vector<16x8xf32> to vector<16x1xf32>
    %31 = vector.broadcast %30 : vector<16x1xf32> to vector<16x100xf32>
    %32 = arith.addf %29, %31 : vector<16x100xf32>
    %33 = vector.extract_strided_slice %0 {offsets = [0, 7], sizes = [16, 1], strides = [1, 1]} : vector<16x8xf32> to vector<16x1xf32>
    %cst = arith.constant 0.000000e+00 : f32
    %34 = vector.broadcast %cst : f32 to vector<16x100xf32>
    %35 = arith.cmpf oge, %32, %34 : vector<16x100xf32>
    %36 = vector.broadcast %33 : vector<16x1xf32> to vector<16x100xf32>
    %37 = arith.mulf %36, %32 : vector<16x100xf32>
    %38 = arith.select %35, %32, %37 : vector<16x100xi1>, vector<16x100xf32>
    %c0_9 = arith.constant 0 : index
    %c0_10 = arith.constant 0 : index
    %39 = vector.load %arg3[%c0_9, %c0_10] : memref<32x16xf32, #tpu.memory_space<vmem>>, vector<32x16xf32>
    %cst_11 = arith.constant dense<0.000000e+00> : vector<32x100xf32>
    %40 = tpu.matmul %39, %38, %cst_11 {dimension_numbers = #tpu.dot_dimension_numbers<[1], [0], [0], [1], [0, 0, 1, 1], [], []>} : vector<32x16xf32>, vector<16x100xf32>, vector<32x100xf32> -> vector<32x100xf32>
    %c0_12 = arith.constant 0 : index
    %c0_13 = arith.constant 0 : index
    %41 = vector.load %arg4[%c0_12, %c0_13] : memref<100x256xf32, #tpu.memory_space<vmem>>, vector<100x256xf32>
    %cst_14 = arith.constant dense<0.000000e+00> : vector<32x256xf32>
    %42 = tpu.matmul %40, %41, %cst_14 {dimension_numbers = #tpu.dot_dimension_numbers<[1], [0], [0], [1], [0, 0, 1, 1], [], []>} : vector<32x100xf32>, vector<100x256xf32>, vector<32x256xf32> -> vector<32x256xf32>
    %c0_15 = arith.constant 0 : index
    %c0_16 = arith.constant 0 : index
    %43 = vector.load %arg5[%c0_15, %c0_16] : memref<32x1xf32, #tpu.memory_space<vmem>>, vector<32x1xf32>
    %44 = vector.broadcast %43 : vector<32x1xf32> to vector<32x256xf32>
    %45 = arith.addf %42, %44 : vector<32x256xf32>
    %c0_17 = arith.constant 0 : index
    %c0_18 = arith.constant 0 : index
    %46 = vector.load %arg6[%c0_17, %c0_18] : memref<32x256xf32, #tpu.memory_space<vmem>>, vector<32x256xf32>
    tpu.vector_store %arg6[%c0_17, %c0_18], %45 {strides = array<i32>} : memref<32x256xf32, #tpu.memory_space<vmem>>, vector<32x256xf32>,
    return
  }
  func.func @transform_0(%arg0: i32) -> (i32, i32) {
    %c0_i32 = arith.constant 0 : i32
    %c0_i32_0 = arith.constant 0 : i32
    return %arg0, %c0_i32 : i32, i32
  }
  func.func @transform_1(%arg0: i32) -> (i32, i32) {
    %c0_i32 = arith.constant 0 : i32
    %c0_i32_0 = arith.constant 0 : i32
    %c0_i32_1 = arith.constant 0 : i32
    return %c0_i32, %c0_i32_0 : i32, i32
  }
  func.func @transform_2(%arg0: i32) -> (i32, i32) {
    %c0_i32 = arith.constant 0 : i32
    %c0_i32_0 = arith.constant 0 : i32
    %c0_i32_1 = arith.constant 0 : i32
    return %c0_i32, %c0_i32_0 : i32, i32
  }
  func.func @transform_3(%arg0: i32) -> (i32, i32) {
    %c0_i32 = arith.constant 0 : i32
    %c0_i32_0 = arith.constant 0 : i32
    %c0_i32_1 = arith.constant 0 : i32
    return %c0_i32, %c0_i32_0 : i32, i32
  }
  func.func @transform_4(%arg0: i32) -> (i32, i32) {
    %c0_i32 = arith.constant 0 : i32
    %c0_i32_0 = arith.constant 0 : i32
    %c0_i32_1 = arith.constant 0 : i32
    return %c0_i32, %c0_i32_0 : i32, i32
  }
  func.func @transform_5(%arg0: i32) -> (i32, i32) {
    %c0_i32 = arith.constant 0 : i32
    %c0_i32_0 = arith.constant 0 : i32
    return %arg0, %c0_i32 : i32, i32
  }
}

</mosaic_0001>

<llo_original>
// kernel: tpu_custom_call.1
$region0: #{tpu_custom_call.1}
  #allocation0 [shape = 'u32[]', space=smem, size = 0x4, offset = 0x4, fixed_abs, tag = 'smem constant byte address 0x4 - core index']
  #allocation1 [shape = 'u32[144,128]{1,0:T(1,128)}', space=vmem, size = 0x12000, scoped, tag = 'internal scratch']
  %s0 = inlined_call_operand.vmem [shape: f32[16,120], index: 0, kind: input, shape index: {}]
  %s1 = inlined_call_operand.vmem [shape: f32[16,8], index: 1, kind: input, shape index: {}]
  %s2 = inlined_call_operand.vmem [shape: f32[32,16], index: 2, kind: input, shape index: {}]
  %s3 = inlined_call_operand.hbm [shape: f32[100,256], index: 3, kind: input, shape index: {}]
  %s4 = inlined_call_operand.vmem [shape: f32[32,1], index: 4, kind: input, shape index: {}]
  %s5 = inlined_call_operand.hbm [shape: f32[32,256], index: 5, kind: output, shape index: {}]
  %s6 = sld [smem:[#allocation0]]
  $region34: #{tpu_custom_call.1} parent=0
    _
  %s8 = ssub.s32 1, %s6
  %s9 = scalar_select 0, %s8, %s6
  $region1: #{tpu_custom_call.1} parent=0
    #allocation2 [shape = 'u8[106496]{0}', space=vmem, size = 0x1a000, scoped, tag = 'input window, operand 3, single buffered']
    #allocation3 [shape = 's32[1]{0}', space=sflag, size = 0x4, scoped, tag = 'scoped memory for tpu_custom_call.1']
    #allocation4 [shape = 's32[1]{0}', space=sflag, size = 0x4, scoped, tag = 'scoped memory for tpu_custom_call.1']
    #allocation5 [shape = 'u8[32768]{0}', space=vmem, size = 0x8000, scoped, tag = 'output window, operand 0, single buffered']
    %10 = vsyncpa [#allocation3], 0
    %11 = vsyncpa [#allocation4], 0
    // Predicated region
    $region2: #{tpu_custom_call.1} parent=1 // pred_check
      _
    $region3: #{tpu_custom_call.1} parent=1 // pred_check_branch
      %13 = sbr.rel (0) target = $region5
    $region4: #{tpu_custom_call.1} parent=1 // pred_region
      _
    $region5: #{tpu_custom_call.1} parent=1 // pred_fallthru
      _
    // Predicated region
    $region6: #{tpu_custom_call.1} parent=1 // pred_check
      _
    $region7: #{tpu_custom_call.1} parent=1 // pred_check_branch
      %15 = sbr.rel (0) target = $region9
    $region8: #{tpu_custom_call.1} parent=1 // pred_region
      _
    $region9: #{tpu_custom_call.1} parent=1 // pred_fallthru
      _
    // Predicated region
    $region10: #{tpu_custom_call.1} parent=1 // pred_check
      _
    $region11: #{tpu_custom_call.1} parent=1 // pred_check_branch
      %17 = sbr.rel (0) target = $region13
    $region12: #{tpu_custom_call.1} parent=1 // pred_region
      _
    $region13: #{tpu_custom_call.1} parent=1 // pred_fallthru
      _
    // Predicated region
    $region14: #{tpu_custom_call.1} parent=1 // pred_check
      _
    $region15: #{tpu_custom_call.1} parent=1 // pred_check_branch
      %19 = sbr.rel (0) target = $region17
    $region16: #{tpu_custom_call.1} parent=1 // pred_region
      %s21 = ssub.s32 3328, 3328
      %22 = vsyncadd [#allocation3], %s21
      %s23 = sshll.u32 [#allocation2], 4
      %s24 = int_to_ptr.vmem [resolvable:$true] %s23
      %29 = dma.hbm_to_vmem [thread:$0]  %s3, 3328, %s24, [#allocation3], 256, 256, 16
    $region17: #{tpu_custom_call.1} parent=1 // pred_fallthru
      _
    // Predicated region
    $region18: #{tpu_custom_call.1} parent=1 // pred_check
      _
    $region19: #{tpu_custom_call.1} parent=1 // pred_check_branch
      %31 = sbr.rel (0) target = $region21
    $region20: #{tpu_custom_call.1} parent=1 // pred_region
      _
    $region21: #{tpu_custom_call.1} parent=1 // pred_fallthru
      _
    // Predicated region
    $region22: #{tpu_custom_call.1} parent=1 // pred_check
      _
    $region23: #{tpu_custom_call.1} parent=1 // pred_check_branch
      %33 = sbr.rel (0) target = $region25
    $region24: #{tpu_custom_call.1} parent=1 // pred_region
      %34 = dma.done [#allocation3], 3328
    $region25: #{tpu_custom_call.1} parent=1 // pred_fallthru
      _
    %v35 = vld [vmem:[%s1] sm:$0xff]
    %v36 = vld [vmem:[%s1 + $0x8] sm:$0xff]
    %v37 = vld [vmem:[%s0] sm:$0xff]
    %v38 = vld [vmem:[%s0 + $0x8] sm:$0xff]
    %40 = vset.pattern.permute.xlu0 0
    %41 = vperm.xlu0 %40, %v35
    %v42 = vpop.permute.xlu0 %41
    %45 = vset.pattern.permute.xlu0 0
    %46 = vperm.xlu0 %45, %v36
    %v47 = vpop.permute.xlu0 %46
    %v49 = vmul.f32 %v37, %v42
    %v50 = vmul.f32 %v38, %v47
    %51 = vset.pattern.permute.xlu0 1
    %52 = vperm.xlu0 %51, %v35
    %v53 = vpop.permute.xlu0 %52
    %55 = vset.pattern.permute.xlu0 1
    %56 = vperm.xlu0 %55, %v36
    %v57 = vpop.permute.xlu0 %56
    %v59 = vmul.f32 %v37, %v53
    %v60 = vmul.f32 %v38, %v57
    %63 = vrot.lane.b32.xlu0 %v59, 118
    %v64 = vpop.permute.xlu0 %63
    %65 = vrot.lane.b32.xlu0 %v60, 118
    %v66 = vpop.permute.xlu0 %65
    %v69 = vadd.f32 %v49, %v64
    %v70 = vadd.f32 %v50, %v66
    %71 = vset.pattern.permute.xlu0 2
    %72 = vperm.xlu0 %71, %v35
    %v73 = vpop.permute.xlu0 %72
    %75 = vset.pattern.permute.xlu0 2
    %76 = vperm.xlu0 %75, %v36
    %v77 = vpop.permute.xlu0 %76
    %v79 = vmul.f32 %v37, %v73
    %v80 = vmul.f32 %v38, %v77
    %83 = vrot.lane.b32.xlu0 %v79, 108
    %v84 = vpop.permute.xlu0 %83
    %85 = vrot.lane.b32.xlu0 %v80, 108
    %v86 = vpop.permute.xlu0 %85
    %v89 = vadd.f32 %v69, %v84
    %v90 = vadd.f32 %v70, %v86
    %91 = vset.pattern.permute.xlu0 3
    %92 = vperm.xlu0 %91, %v35
    %v93 = vpop.permute.xlu0 %92
    %95 = vset.pattern.permute.xlu0 3
    %96 = vperm.xlu0 %95, %v36
    %v97 = vpop.permute.xlu0 %96
    %v99 = vmul.f32 %v37, %v93
    %v100 = vmul.f32 %v38, %v97
    %103 = vrot.lane.b32.xlu0 %v99, 119
    %v104 = vpop.permute.xlu0 %103
    %105 = vrot.lane.b32.xlu0 %v100, 119
    %v106 = vpop.permute.xlu0 %105
    %v109 = vadd.f32 %v89, %v104
    %v110 = vadd.f32 %v90, %v106
    %111 = vset.pattern.permute.xlu0 4
    %112 = vperm.xlu0 %111, %v35
    %v113 = vpop.permute.xlu0 %112
    %115 = vset.pattern.permute.xlu0 4
    %116 = vperm.xlu0 %115, %v36
    %v117 = vpop.permute.xlu0 %116
    %v119 = vmul.f32 %v37, %v113
    %v120 = vmul.f32 %v38, %v117
    %123 = vrot.lane.b32.xlu0 %v119, 118
    %v124 = vpop.permute.xlu0 %123
    %125 = vrot.lane.b32.xlu0 %v120, 118
    %v126 = vpop.permute.xlu0 %125
    %v129 = vadd.f32 %v109, %v124
    %v130 = vadd.f32 %v110, %v126
    %131 = vset.pattern.permute.xlu0 5
    %132 = vperm.xlu0 %131, %v35
    %v133 = vpop.permute.xlu0 %132
    %135 = vset.pattern.permute.xlu0 5
    %136 = vperm.xlu0 %135, %v36
    %v137 = vpop.permute.xlu0 %136
    %v139 = vmul.f32 %v37, %v133
    %v140 = vmul.f32 %v38, %v137
    %143 = vrot.lane.b32.xlu0 %v139, 117
    %v144 = vpop.permute.xlu0 %143
    %145 = vrot.lane.b32.xlu0 %v140, 117
    %v146 = vpop.permute.xlu0 %145
    %v149 = vadd.f32 %v129, %v144
    %v150 = vadd.f32 %v130, %v146
    %151 = vset.pattern.permute.xlu0 6
    %152 = vperm.xlu0 %151, %v35
    %v153 = vpop.permute.xlu0 %152
    %155 = vset.pattern.permute.xlu0 6
    %156 = vperm.xlu0 %155, %v36
    %v157 = vpop.permute.xlu0 %156
    %v159 = vadd.f32 %v149, %v153
    %v160 = vadd.f32 %v150, %v157
    %vm161 = vcmp.ge.f32.partialorder %v159, 0.0
    %vm162 = vcmp.ge.f32.partialorder %v160, 0.0
    %163 = vset.pattern.permute.xlu0 7
    %164 = vperm.xlu0 %163, %v35
    %v165 = vpop.permute.xlu0 %164
    %167 = vset.pattern.permute.xlu0 7
    %168 = vperm.xlu0 %167, %v36
    %v169 = vpop.permute.xlu0 %168
    %v171 = vmul.f32 %v165, %v159
    %v172 = vmul.f32 %v169, %v160
    %v173 = vsel %vm161, %v159, %v171
    %v174 = vsel %vm162, %v160, %v172
    %v175 = vld [vmem:[%s2] sm:$0xff]
    %v176 = vld [vmem:[%s2 + $0x8] sm:$0xff]
    %v177 = vld [vmem:[%s2 + $0x10] sm:$0xff]
    %v178 = vld [vmem:[%s2 + $0x18] sm:$0xff]
    %vm179 = vcmask 130048
    %v181 = vsel %vm179, %v175, 0
    %v184 = vsel %vm179, %v176, 0
    %v187 = vsel %vm179, %v177, 0
    %v190 = vsel %vm179, %v178, 0
    %192 = vmatprep.subr.mxu0 0.0
    %193 = vmatpush1.msra.mxu0 %v173
    %194 = vmatprep.subr.mxu0 0.0
    %195 = vmatpush1.msra.mxu0 %v174
    %196 = vmatprep.subr.mxu0 0.0
    %197 = vmatpush1.msra.mxu0 0.0
    %198 = vmatprep.subr.mxu0 0.0
    %199 = vmatpush1.msra.mxu0 0.0
    %200 = vmatprep.subr.mxu0 0.0
    %201 = vmatpush1.msra.mxu0 0.0
    %202 = vmatprep.subr.mxu0 0.0
    %203 = vmatpush1.msra.mxu0 0.0
    %204 = vmatprep.subr.mxu0 0.0
    %205 = vmatpush1.msra.mxu0 0.0
    %206 = vmatprep.subr.mxu0 0.0
    %207 = vmatpush1.msra.mxu0 0.0
    %208 = vmatprep.subr.mxu0 0.0
    %209 = vmatpush1.msra.mxu0 0.0
    %210 = vmatprep.subr.mxu0 0.0
    %211 = vmatpush1.msra.mxu0 0.0
    %212 = vmatprep.subr.mxu0 0.0
    %213 = vmatpush1.msra.mxu0 0.0
    %214 = vmatprep.subr.mxu0 0.0
    %215 = vmatpush1.msra.mxu0 0.0
    %216 = vmatprep.subr.mxu0 0.0
    %217 = vmatpush1.msra.mxu0 0.0
    %218 = vmatprep.subr.mxu0 0.0
    %219 = vmatpush1.msra.mxu0 0.0
    %220 = vmatprep.subr.mxu0 0.0
    %221 = vmatpush1.msra.mxu0 0.0
    %222 = vmatprep.subr.mxu0 0.0
    %223 = vmatpush1.msra.mxu0 0.0
    %224 = vmatprep.subr.mxu0 0.0
    %225 = vmatpush1.msra.mxu0 0.0
    %226 = vmatprep.subr.mxu0 0.0
    %227 = vmatpush1.msra.mxu0 0.0
    %228 = vmatprep.subr.mxu0 0.0
    %229 = vmatpush1.msra.mxu0 0.0
    %230 = vmatprep.subr.mxu0 0.0
    %231 = vmatpush1.msra.mxu0 0.0
    %232 = vmatprep.subr.mxu0 0.0
    %233 = vmatpush1.msra.mxu0 0.0
    %234 = vmatprep.subr.mxu0 0.0
    %235 = vmatpush1.msra.mxu0 0.0
    %236 = vmatprep.subr.mxu0 0.0
    %237 = vmatpush1.msra.mxu0 0.0
    %238 = vmatprep.subr.mxu0 0.0
    %239 = vmatpush1.msra.mxu0 0.0
    %240 = vmatprep.subr.mxu0 0.0
    %241 = vmatpush1.msra.mxu0 0.0
    %242 = vmatprep.subr.mxu0 0.0
    %243 = vmatpush1.msra.mxu0 0.0
    %244 = vmatprep.subr.mxu0 0.0
    %245 = vmatpush1.msra.mxu0 0.0
    %246 = vmatprep.subr.mxu0 0.0
    %247 = vmatpush1.msra.mxu0 0.0
    %248 = vmatprep.subr.mxu0 0.0
    %249 = vmatpush1.msra.mxu0 0.0
    %250 = vmatprep.subr.mxu0 0.0
    %251 = vmatpush1.msra.mxu0 0.0
    %252 = vmatprep.subr.mxu0 0.0
    %253 = vmatpush1.msra.mxu0 0.0
    %254 = vmatprep.subr.mxu0 0.0
    %255 = vmatpush1.msra.mxu0 0.0
    %256 = vmatprep.mubr.f32.mxu0 0.0
    %257 = vmatmul.mubr.f32.gmra.mrb[0].mxu0 %v181
    %v258 = vpop.f32.mrb[0].mxu0
    %v259 = vadd.f32 0.0, %v258
    %v260 = vpop.f32.mrb[0].mxu0
    %261 = vmatprep.mubr.f32.mxu0 0.0
    %262 = vmatmul.mubr.f32.gmra.mrb[0].mxu0 %v184
    %v263 = vpop.f32.mrb[0].mxu0
    %v264 = vadd.f32 0.0, %v263
    %v265 = vpop.f32.mrb[0].mxu0
    %266 = vmatprep.mubr.f32.mxu0 0.0
    %267 = vmatmul.mubr.f32.gmra.mrb[0].mxu0 %v187
    %v268 = vpop.f32.mrb[0].mxu0
    %v269 = vadd.f32 0.0, %v268
    %v270 = vpop.f32.mrb[0].mxu0
    %271 = vmatprep.mubr.f32.mxu0 0.0
    %272 = vmatmul.mubr.f32.gmra.mrb[0].mxu0 %v190
    %v273 = vpop.f32.mrb[0].mxu0
    %v274 = vadd.f32 0.0, %v273
    %v275 = vpop.f32.mrb[0].mxu0
    %276 = vdwg.mxu0
    %v277 = vld [vmem:[#allocation2] sm:$0xff]
    %v278 = vld [vmem:[#allocation2 + $0x8] sm:$0xff]
    %v279 = vld [vmem:[#allocation2 + $0x10] sm:$0xff]
    %v280 = vld [vmem:[#allocation2 + $0x18] sm:$0xff]
    %v281 = vld [vmem:[#allocation2 + $0x20] sm:$0xff]
    %v282 = vld [vmem:[#allocation2 + $0x28] sm:$0xff]
    %v283 = vld [vmem:[#allocation2 + $0x30] sm:$0xff]
    %v284 = vld [vmem:[#allocation2 + $0x38] sm:$0xff]
    %v285 = vld [vmem:[#allocation2 + $0x40] sm:$0xff]
    %v286 = vld [vmem:[#allocation2 + $0x48] sm:$0xff]
    %v287 = vld [vmem:[#allocation2 + $0x50] sm:$0xff]
    %v288 = vld [vmem:[#allocation2 + $0x58] sm:$0xff]
    %v289 = vld [vmem:[#allocation2 + $0x60] sm:$0xff]
    %v290 = vld [vmem:[#allocation2 + $0x68] sm:$0xff]
    %v291 = vld [vmem:[#allocation2 + $0x70] sm:$0xff]
    %v292 = vld [vmem:[#allocation2 + $0x78] sm:$0xff]
    %v293 = vld [vmem:[#allocation2 + $0x80] sm:$0xff]
    %v294 = vld [vmem:[#allocation2 + $0x88] sm:$0xff]
    %v295 = vld [vmem:[#allocation2 + $0x90] sm:$0xff]
    %v296 = vld [vmem:[#allocation2 + $0x98] sm:$0xff]
    %v297 = vld [vmem:[#allocation2 + $0xa0] sm:$0xff]
    %v298 = vld [vmem:[#allocation2 + $0xa8] sm:$0xff]
    %v299 = vld [vmem:[#allocation2 + $0xb0] sm:$0xff]
    %v300 = vld [vmem:[#allocation2 + $0xb8] sm:$0xff]
    %v301 = vld [vmem:[#allocation2 + $0xc0] sm:$0xf]
    %v302 = vld [vmem:[#allocation2 + $0xc8] sm:$0xf]
    %v303 = vld [vmem:[%s4] sm:$0xff]
    %v304 = vld [vmem:[%s4 + $0x8] sm:$0xff]
    %v305 = vld [vmem:[%s4 + $0x10] sm:$0xff]
    %v306 = vld [vmem:[%s4 + $0x18] sm:$0xff]
    %308 = vset.pattern.permute.xlu0 0
    %309 = vperm.xlu0 %308, %v303
    %v310 = vpop.permute.xlu0 %309
    %313 = vset.pattern.permute.xlu0 0
    %314 = vperm.xlu0 %313, %v304
    %v315 = vpop.permute.xlu0 %314
    %318 = vset.pattern.permute.xlu0 0
    %319 = vperm.xlu0 %318, %v305
    %v320 = vpop.permute.xlu0 %319
    %323 = vset.pattern.permute.xlu0 0
    %324 = vperm.xlu0 %323, %v306
    %v325 = vpop.permute.xlu0 %324
    %vm327 = vcmask 818176
    %v329 = vsel %vm327, %v259, 0
    %v332 = vsel %vm327, %v264, 0
    %v335 = vsel %vm327, %v269, 0
    %v338 = vsel %vm327, %v274, 0
    %vm340 = vcmask 1043456
    %v342 = vsel %vm340, %v301, 0
    %v345 = vsel %vm340, %v302, 0
    %347 = vmatprep.subr.mxu0 %v278
    %348 = vmatpush1.msra.mxu0 %v277
    %349 = vmatprep.subr.mxu0 %v280
    %350 = vmatpush1.msra.mxu0 %v279
    %351 = vmatprep.subr.mxu0 %v282
    %352 = vmatpush1.msra.mxu0 %v281
    %353 = vmatprep.subr.mxu0 %v284
    %354 = vmatpush1.msra.mxu0 %v283
    %355 = vmatprep.subr.mxu0 %v286
    %356 = vmatpush1.msra.mxu0 %v285
    %357 = vmatprep.subr.mxu0 %v288
    %358 = vmatpush1.msra.mxu0 %v287
    %359 = vmatprep.subr.mxu0 %v290
    %360 = vmatpush1.msra.mxu0 %v289
    %361 = vmatprep.subr.mxu0 %v292
    %362 = vmatpush1.msra.mxu0 %v291
    %363 = vmatprep.subr.mxu0 %v294
    %364 = vmatpush1.msra.mxu0 %v293
    %365 = vmatprep.subr.mxu0 %v296
    %366 = vmatpush1.msra.mxu0 %v295
    %367 = vmatprep.subr.mxu0 %v298
    %368 = vmatpush1.msra.mxu0 %v297
    %369 = vmatprep.subr.mxu0 %v300
    %370 = vmatpush1.msra.mxu0 %v299
    %371 = vmatprep.subr.mxu0 %v345
    %372 = vmatpush1.msra.mxu0 %v342
    %373 = vmatprep.subr.mxu0 0.0
    %374 = vmatpush1.msra.mxu0 0.0
    %375 = vmatprep.subr.mxu0 0.0
    %376 = vmatpush1.msra.mxu0 0.0
    %377 = vmatprep.subr.mxu0 0.0
    %378 = vmatpush1.msra.mxu0 0.0
    %379 = vmatprep.subr.mxu0 0.0
    %380 = vmatpush1.msra.mxu0 0.0
    %381 = vmatprep.subr.mxu0 0.0
    %382 = vmatpush1.msra.mxu0 0.0
    %383 = vmatprep.subr.mxu0 0.0
    %384 = vmatpush1.msra.mxu0 0.0
    %385 = vmatprep.subr.mxu0 0.0
    %386 = vmatpush1.msra.mxu0 0.0
    %387 = vmatprep.subr.mxu0 0.0
    %388 = vmatpush1.msra.mxu0 0.0
    %389 = vmatprep.subr.mxu0 0.0
    %390 = vmatpush1.msra.mxu0 0.0
    %391 = vmatprep.subr.mxu0 0.0
    %392 = vmatpush1.msra.mxu0 0.0
    %393 = vmatprep.subr.mxu0 0.0
    %394 = vmatpush1.msra.mxu0 0.0
    %395 = vmatprep.subr.mxu0 0.0
    %396 = vmatpush1.msra.mxu0 0.0
    %397 = vmatprep.subr.mxu0 0.0
    %398 = vmatpush1.msra.mxu0 0.0
    %399 = vmatprep.subr.mxu0 0.0
    %400 = vmatpush1.msra.mxu0 0.0
    %401 = vmatprep.subr.mxu0 0.0
    %402 = vmatpush1.msra.mxu0 0.0
    %403 = vmatprep.subr.mxu0 0.0
    %404 = vmatpush1.msra.mxu0 0.0
    %405 = vmatprep.subr.mxu0 0.0
    %406 = vmatpush1.msra.mxu0 0.0
    %407 = vmatprep.subr.mxu0 0.0
    %408 = vmatpush1.msra.mxu0 0.0
    %409 = vmatprep.subr.mxu0 0.0
    %410 = vmatpush1.msra.mxu0 0.0
    %411 = vmatprep.mubr.f32.mxu0 0.0
    %412 = vmatmul.mubr.f32.gmra.mrb[0].mxu0 %v329
    %v413 = vpop.f32.mrb[0].mxu0
    %v414 = vadd.f32 %v310, %v413
    %v415 = vpop.f32.mrb[0].mxu0
    %v416 = vadd.f32 %v310, %v415
    %417 = vmatprep.mubr.f32.mxu0 0.0
    %418 = vmatmul.mubr.f32.gmra.mrb[0].mxu0 %v332
    %v419 = vpop.f32.mrb[0].mxu0
    %v420 = vadd.f32 %v315, %v419
    %v421 = vpop.f32.mrb[0].mxu0
    %v422 = vadd.f32 %v315, %v421
    %423 = vmatprep.mubr.f32.mxu0 0.0
    %424 = vmatmul.mubr.f32.gmra.mrb[0].mxu0 %v335
    %v425 = vpop.f32.mrb[0].mxu0
    %v426 = vadd.f32 %v320, %v425
    %v427 = vpop.f32.mrb[0].mxu0
    %v428 = vadd.f32 %v320, %v427
    %429 = vmatprep.mubr.f32.mxu0 0.0
    %430 = vmatmul.mubr.f32.gmra.mrb[0].mxu0 %v338
    %v431 = vpop.f32.mrb[0].mxu0
    %v432 = vadd.f32 %v325, %v431
    %v433 = vpop.f32.mrb[0].mxu0
    %v434 = vadd.f32 %v325, %v433
    %435 = vdwg.mxu0
    %436 = vst [vmem:[#allocation5] sm:$0xff] %v414
    %437 = vst [vmem:[#allocation5 + $0x8] sm:$0xff] %v416
    %438 = vst [vmem:[#allocation5 + $0x10] sm:$0xff] %v420
    %439 = vst [vmem:[#allocation5 + $0x18] sm:$0xff] %v422
    %440 = vst [vmem:[#allocation5 + $0x20] sm:$0xff] %v426
    %441 = vst [vmem:[#allocation5 + $0x28] sm:$0xff] %v428
    %442 = vst [vmem:[#allocation5 + $0x30] sm:$0xff] %v432
    %443 = vst [vmem:[#allocation5 + $0x38] sm:$0xff] %v434
    // Predicated region
    $region26: #{tpu_custom_call.1} parent=1 // pred_check
      _
    $region27: #{tpu_custom_call.1} parent=1 // pred_check_branch
      %445 = sbr.rel (0) target = $region29
    $region28: #{tpu_custom_call.1} parent=1 // pred_region
      %s447 = ssub.s32 1024, 1024
      %448 = vsyncadd [#allocation4], %s447
      %s449 = sshll.u32 [#allocation5], 4
      %s450 = int_to_ptr.vmem [resolvable:$true] %s449
      %455 = dma.vmem_to_hbm [thread:$0]  %s450, 1024, %s5, [#allocation4], 256, 256, 16
    $region29: #{tpu_custom_call.1} parent=1 // pred_fallthru
      _
    // Predicated region
    $region30: #{tpu_custom_call.1} parent=1 // pred_check
      _
    $region31: #{tpu_custom_call.1} parent=1 // pred_check_branch
      %457 = sbr.rel (0) target = $region33
    $region32: #{tpu_custom_call.1} parent=1 // pred_region
      %458 = dma.done [#allocation4], 1024
    $region33: #{tpu_custom_call.1} parent=1 // pred_fallthru
      _
    %459 = vsyncpa [#allocation3], 1
    %460 = vsyncpa [#allocation4], 1

</llo_original>
